<compile_context>
chip_gen: v7x
topology: tpu7x:2x2x1
jax: 0.10.0
libtpu: 0.0.40
codegen_flags: <defaults>
</compile_context>

<pallas_src>
import jax
import jax.numpy as jnp
from jax import lax
from jax.experimental import pallas as pl
from jax.experimental.pallas import tpu as pltpu

_LANES = 128
_VMEM_LIMIT_BYTES = 48 * 1024 * 1024   # < v7x 64 MiB physical, > default scoped limits
_VMEM_TILE_BUDGET = 32 * 1024 * 1024   # tile-sizing target (leaves ~30% headroom)


def _round_up(x, m):
    return (x + m - 1) // m * m


def _choose_tile_b(B, F, O):
    """Batch tile (multiple of 128) sized against the VMEM budget.

    Accounts for double-buffered x and output tiles plus a resident weight
    buffer so the same tile compiles on v7x (64 MiB VMEM) and v5e/v6e (128 MiB).
    """
    bytes_per_row = 2 * 4 * (F + max(O, _LANES))   # x + out tiles, 2x buffered, f32
    resident = 2 * 4 * F * max(O, 1)               # weight buffers
    avail = _VMEM_TILE_BUDGET - resident
    if avail < bytes_per_row * _LANES:
        tile = _LANES
    else:
        tile = (avail // bytes_per_row) // _LANES * _LANES
    tile = max(_LANES, min(1024, tile))
    return min(tile, _round_up(B, _LANES))


# ----------------------------- kernels --------------------------------------

def _decay_vpu_kernel(x_ref, w_ref, o_ref):
    # O == 1 lane-dense path.
    # x_ref: [rows, 128, F], w_ref: [1, 1, F], o_ref: [1, rows, 128]
    z = jnp.sum(x_ref[...] * w_ref[...], axis=-1)          # VPU mul + XLU lane reduce
    o_ref[0] = jnp.exp(-jnp.maximum(z, 0.0)).astype(o_ref.dtype)


def _decay_vpu_bias_kernel(x_ref, w_ref, b_ref, o_ref):
    # Same as above, bias is a scalar held in SMEM: b_ref: [1]
    z = jnp.sum(x_ref[...] * w_ref[...], axis=-1) + b_ref[0]
    o_ref[0] = jnp.exp(-jnp.maximum(z, 0.0)).astype(o_ref.dtype)


def _decay_mxu_kernel(x_ref, w_ref, o_ref):
    # O >= 2 path. x_ref: [TB, F], w_ref: [O, F] (PyTorch layout, contract over
    # the last dims so no wrapper-side transpose), o_ref: [TB, O]
    z = lax.dot_general(
        x_ref[...], w_ref[...],
        dimension_numbers=(((1,), (1,)), ((), ())),
        preferred_element_type=jnp.float32,
        precision=lax.Precision.HIGHEST)
    o_ref[...] = jnp.exp(-jnp.maximum(z, 0.0)).astype(o_ref.dtype)


def _decay_mxu_bias_kernel(x_ref, w_ref, b_ref, o_ref):
    z = lax.dot_general(
        x_ref[...], w_ref[...],
        dimension_numbers=(((1,), (1,)), ((), ())),
        preferred_element_type=jnp.float32,
        precision=lax.Precision.HIGHEST)
    z = z + b_ref[...]                                      # b_ref: [1, O]
    o_ref[...] = jnp.exp(-jnp.maximum(z, 0.0)).astype(o_ref.dtype)


# ----------------------------- wrapper ---------------------------------------

def temporal_decay_regression(inputs, weight, bias=None, *, tile_b=None):
    """gamma = exp(-relu(inputs @ weight.T [+ bias]))

    inputs: [B, F] float32
    weight: [O, F] float32 (PyTorch Linear convention)
    bias:   optional [O] float32 (interactions=True path)
    returns [B, O] float32
    """
    B, F = inputs.shape
    O, F2 = weight.shape
    assert F == F2, "feature dims must match"

    x = inputs.astype(jnp.float32)
    w = weight.astype(jnp.float32)

    if tile_b is None:
        tile_b = _choose_tile_b(B, F, O)
    assert tile_b % _LANES == 0 and tile_b > 0

    b_pad = _round_up(B, tile_b)
    if b_pad != B:
        x = jnp.pad(x, ((0, b_pad - B), (0, 0)))
    grid = (b_pad // tile_b,)

    compiler_params = pltpu.CompilerParams(
        dimension_semantics=("parallel",),
        vmem_limit_bytes=_VMEM_LIMIT_BYTES)
    cost = pl.CostEstimate(
        flops=2 * b_pad * F * O,
        transcendentals=b_pad * O,
        bytes_accessed=4 * (b_pad * F + F * O + b_pad * O))

    if O == 1:
        # Lane-dense path: view x as [B/128, 128, F]; output a [grid, rows, 128]
        # slab (unmasked full-lane stores) and reshape back to (B, 1) outside.
        rows = tile_b // _LANES
        x3 = x.reshape(b_pad // _LANES, _LANES, F)
        w3 = w.reshape(1, 1, F)

        x_spec = pl.BlockSpec((rows, _LANES, F), lambda i: (i, 0, 0))
        w_spec = pl.BlockSpec((1, 1, F), lambda i: (0, 0, 0))
        o_spec = pl.BlockSpec((1, rows, _LANES), lambda i: (i, 0, 0))
        out_shape = jax.ShapeDtypeStruct((grid[0], rows, _LANES), jnp.float32)

        if bias is None:
            out = pl.pallas_call(
                _decay_vpu_kernel,
                grid=grid,
                in_specs=[x_spec, w_spec],
                out_specs=o_spec,
                out_shape=out_shape,
                compiler_params=compiler_params,
                cost_estimate=cost,
            )(x3, w3)
        else:
            b_sm = bias.reshape(1).astype(jnp.float32)
            b_spec = pl.BlockSpec(memory_space=pltpu.MemorySpace.SMEM)
            out = pl.pallas_call(
                _decay_vpu_bias_kernel,
                grid=grid,
                in_specs=[x_spec, w_spec, b_spec],
                out_specs=o_spec,
                out_shape=out_shape,
                compiler_params=compiler_params,
                cost_estimate=cost,
            )(x3, w3, b_sm)
        return out.reshape(b_pad, 1)[:B]

    # O >= 2: MXU path, weight resident across all batch tiles.
    # TODO(synk): for 2 <= O < 128 a fully lane-dense VPU layout would avoid the
    # MXU N-padding to 128; kept on the MXU for simplicity/generality.
    x_spec = pl.BlockSpec((tile_b, F), lambda i: (i, 0))
    w_spec = pl.BlockSpec((O, F), lambda i: (0, 0))
    o_spec = pl.BlockSpec((tile_b, O), lambda i: (i, 0))
    out_shape = jax.ShapeDtypeStruct((b_pad, O), jnp.float32)

    if bias is None:
        out = pl.pallas_call(
            _decay_mxu_kernel,
            grid=grid,
            in_specs=[x_spec, w_spec],
            out_specs=o_spec,
            out_shape=out_shape,
            compiler_params=compiler_params,
            cost_estimate=cost,
        )(x, w)
    else:
        b2 = bias.reshape(1, O).astype(jnp.float32)
        b_spec = pl.BlockSpec((1, O), lambda i: (0, 0))
        out = pl.pallas_call(
            _decay_mxu_bias_kernel,
            grid=grid,
            in_specs=[x_spec, w_spec, b_spec],
            out_specs=o_spec,
            out_shape=out_shape,
            compiler_params=compiler_params,
            cost_estimate=cost,
        )(x, w, b2)
    return out[:B]


# ----------------------------- test harness ----------------------------------

def xavier_normal(key, shape):
    # nn.init.xavier_normal_ for a 2-D weight (fan_out, fan_in):
    fan_out, fan_in = shape
    std = (2.0 / (fan_in + fan_out)) ** 0.5
    return std * jax.random.normal(key, shape, dtype=jnp.float32)


def _reference(x, weight, bias=None):
    # Exact f32 elementwise reference: exp(-relu(x @ W.T [+ b]))
    z = jnp.sum(x[:, None, :] * weight[None, :, :], axis=-1)
    if bias is not None:
        z = z + bias
    return jnp.exp(-jnp.maximum(z, 0.0))


if __name__ == "__main__":
    key = jax.random.PRNGKey(0)
    k_x, k_w, k_b, k_w2, k_b2 = jax.random.split(key, 5)

    batch, input_size = 300, 32
    x = jax.random.normal(k_x, (batch, input_size), dtype=jnp.float32)

    # ---- default config: output_size=1, interactions=False (no bias) ----
    w1 = xavier_normal(k_w, (1, input_size))
    got = jax.block_until_ready(temporal_decay_regression(x, w1))
    want = _reference(x, w1)
    assert got.shape == (batch, 1)
    assert jnp.allclose(got, want, atol=1e-5, rtol=1e-5)

    # Same math, forcing a multi-step grid (tile_b=128 -> 3 tiles + row padding).
    got_tiled = jax.block_until_ready(
        temporal_decay_regression(x, w1, tile_b=128))
    assert jnp.allclose(got_tiled, want, atol=1e-5, rtol=1e-5)

    # ---- interactions=True, output_size=1 (Linear with bias, VPU path) ----
    b1 = 0.1 * jax.random.normal(k_b, (1,), dtype=jnp.float32)
    got_b = jax.block_until_ready(temporal_decay_regression(x, w1, b1))
    assert jnp.allclose(got_b, _reference(x, w1, b1), atol=1e-5, rtol=1e-5)

    # ---- output_size=4 (MXU path), without and with bias ----
    out_size = 4
    w4 = xavier_normal(k_w2, (out_size, input_size))
    got4 = jax.block_until_ready(temporal_decay_regression(x, w4))
    assert got4.shape == (batch, out_size)
    assert jnp.allclose(got4, _reference(x, w4), atol=1e-5, rtol=1e-5)

    b4 = 0.1 * jax.random.normal(k_b2, (out_size,), dtype=jnp.float32)
    got4b = jax.block_until_ready(temporal_decay_regression(x, w4, b4))
    assert jnp.allclose(got4b, _reference(x, w4, b4), atol=1e-5, rtol=1e-5)

    print("KERNEL_OK")
</pallas_src>

<mosaic_0001>
module attributes {stable_mosaic.version = 11 : i64} {
  func.func @_decay_vpu_kernel(%arg0: i32, %arg1: memref<3x128x32xf32, #tpu.memory_space<vmem>>, %arg2: memref<1x1x32xf32, #tpu.memory_space<vmem>>, %arg3: memref<1x3x128xf32, #tpu.memory_space<vmem>>) attributes {dimension_semantics = [#tpu.dimension_semantics<parallel>], iteration_bounds = array<i64: 1>, scalar_prefetch = 0 : i64, scratch_operands = 0 : i64, tpu.core_type = #tpu.core_type<tc>, window_params = [{transform_indices = @transform_0, window_bounds = array<i64: 3, 128, 32>}, {pipeline_mode = #tpu.pipeline_mode<synchronous>, transform_indices = @transform_1, window_bounds = array<i64: 1, 1, 32>}, {transform_indices = @transform_2, window_bounds = array<i64: 1, 3, 128>}]} {
    %c0 = arith.constant 0 : index
    %c0_0 = arith.constant 0 : index
    %c0_1 = arith.constant 0 : index
    %0 = vector.load %arg1[%c0, %c0_0, %c0_1] : memref<3x128x32xf32, #tpu.memory_space<vmem>>, vector<3x128x32xf32>
    %c0_2 = arith.constant 0 : index
    %c0_3 = arith.constant 0 : index
    %c0_4 = arith.constant 0 : index
    %1 = vector.load %arg2[%c0_2, %c0_3, %c0_4] : memref<1x1x32xf32, #tpu.memory_space<vmem>>, vector<1x1x32xf32>
    %2 = vector.broadcast %1 : vector<1x1x32xf32> to vector<3x128x32xf32>
    %3 = arith.mulf %0, %2 : vector<3x128x32xf32>
    %cst = arith.constant dense<0.000000e+00> : vector<3x128xf32>
    %4 = vector.multi_reduction <add>, %3, %cst [2] : vector<3x128x32xf32> to vector<3x128xf32>
    %cst_5 = arith.constant 0.000000e+00 : f32
    %5 = vector.broadcast %cst_5 : f32 to vector<3x128xf32>
    %6 = arith.maximumf %4, %5 : vector<3x128xf32>
    %cst_6 = arith.constant 0.000000e+00 : f32
    %7 = vector.broadcast %cst_6 : f32 to vector<3x128xf32>
    %8 = arith.subf %7, %6 : vector<3x128xf32>
    %9 = math.exp %8 : vector<3x128xf32>
    %c0_7 = arith.constant 0 : index
    %c0_8 = arith.constant 0 : index
    %c0_9 = arith.constant 0 : index
    %10 = vector.load %arg3[%c0_7, %c0_8, %c0_9] : memref<1x3x128xf32, #tpu.memory_space<vmem>>, vector<1x3x128xf32>
    %11 = vector.shape_cast %10 : vector<1x3x128xf32> to vector<3x128xf32>
    %12 = vector.shape_cast %9 : vector<3x128xf32> to vector<1x3x128xf32>
    tpu.vector_store %arg3[%c0_7, %c0_8, %c0_9], %12 {strides = array<i32>} : memref<1x3x128xf32, #tpu.memory_space<vmem>>, vector<1x3x128xf32>,
    return
  }
  func.func @transform_0(%arg0: i32) -> (i32, i32, i32) {
    %c0_i32 = arith.constant 0 : i32
    %c0_i32_0 = arith.constant 0 : i32
    %c0_i32_1 = arith.constant 0 : i32
    return %arg0, %c0_i32, %c0_i32_0 : i32, i32, i32
  }
  func.func @transform_1(%arg0: i32) -> (i32, i32, i32) {
    %c0_i32 = arith.constant 0 : i32
    %c0_i32_0 = arith.constant 0 : i32
    %c0_i32_1 = arith.constant 0 : i32
    %c0_i32_2 = arith.constant 0 : i32
    return %c0_i32, %c0_i32_0, %c0_i32_1 : i32, i32, i32
  }
  func.func @transform_2(%arg0: i32) -> (i32, i32, i32) {
    %c0_i32 = arith.constant 0 : i32
    %c0_i32_0 = arith.constant 0 : i32
    %c0_i32_1 = arith.constant 0 : i32
    return %arg0, %c0_i32, %c0_i32_0 : i32, i32, i32
  }
}

</mosaic_0001>

<llo_original>
// kernel: tpu_custom_call.1
$region0: #{tpu_custom_call.1}
  #allocation0 [shape = 'u32[]', space=smem, size = 0x4, offset = 0x4, fixed_abs, tag = 'smem constant byte address 0x4 - core index']
  #allocation1 [shape = 'u32[144,128]{1,0:T(1,128)}', space=vmem, size = 0x12000, scoped, tag = 'internal scratch']
  %s0 = inlined_call_operand.vmem [shape: f32[3,128,32], index: 0, kind: input, shape index: {}]
  %s1 = inlined_call_operand.vmem [shape: f32[1,1,32], index: 1, kind: input, shape index: {}]
  %s2 = inlined_call_operand.vmem [shape: f32[1,3,128], index: 2, kind: output, shape index: {}]
  %s3 = sld [smem:[#allocation0]]
  $region18: #{tpu_custom_call.1} parent=0
    _
  %s5 = ssub.s32 1, %s3
  %s6 = scalar_select 0, %s5, %s3
  // Predicated region
  $region2: #{tpu_custom_call.1} parent=0 // pred_check
    _
  $region3: #{tpu_custom_call.1} parent=0 // pred_check_branch
    %8 = sbr.rel (0) target = $region5
  $region4: #{tpu_custom_call.1} parent=0 // pred_region
    _
  $region5: #{tpu_custom_call.1} parent=0 // pred_fallthru
    _
  // Predicated region
  $region6: #{tpu_custom_call.1} parent=0 // pred_check
    _
  $region7: #{tpu_custom_call.1} parent=0 // pred_check_branch
    %10 = sbr.rel (0) target = $region9
  $region8: #{tpu_custom_call.1} parent=0 // pred_region
    _
  $region9: #{tpu_custom_call.1} parent=0 // pred_fallthru
    _
  %v11 = vld [vmem:[%s0] sm:$0xff]
  %v12 = vld [vmem:[%s0 + $0x8] sm:$0xff]
  %v13 = vld [vmem:[%s0 + $0x10] sm:$0xff]
  %v14 = vld [vmem:[%s0 + $0x18] sm:$0xff]
  %v15 = vld [vmem:[%s0 + $0x20] sm:$0xff]
  %v16 = vld [vmem:[%s0 + $0x28] sm:$0xff]
  %v17 = vld [vmem:[%s0 + $0x30] sm:$0xff]
  %v18 = vld [vmem:[%s0 + $0x38] sm:$0xff]
  %v19 = vld [vmem:[%s0 + $0x40] sm:$0xff]
  %v20 = vld [vmem:[%s0 + $0x48] sm:$0xff]
  %v21 = vld [vmem:[%s0 + $0x50] sm:$0xff]
  %v22 = vld [vmem:[%s0 + $0x58] sm:$0xff]
  %v23 = vld [vmem:[%s0 + $0x60] sm:$0xff]
  %v24 = vld [vmem:[%s0 + $0x68] sm:$0xff]
  %v25 = vld [vmem:[%s0 + $0x70] sm:$0xff]
  %v26 = vld [vmem:[%s0 + $0x78] sm:$0xff]
  %v27 = vld [vmem:[%s0 + $0x80] sm:$0xff]
  %v28 = vld [vmem:[%s0 + $0x88] sm:$0xff]
  %v29 = vld [vmem:[%s0 + $0x90] sm:$0xff]
  %v30 = vld [vmem:[%s0 + $0x98] sm:$0xff]
  %v31 = vld [vmem:[%s0 + $0xa0] sm:$0xff]
  %v32 = vld [vmem:[%s0 + $0xa8] sm:$0xff]
  %v33 = vld [vmem:[%s0 + $0xb0] sm:$0xff]
  %v34 = vld [vmem:[%s0 + $0xb8] sm:$0xff]
  %v35 = vld [vmem:[%s0 + $0xc0] sm:$0xff]
  %v36 = vld [vmem:[%s0 + $0xc8] sm:$0xff]
  %v37 = vld [vmem:[%s0 + $0xd0] sm:$0xff]
  %v38 = vld [vmem:[%s0 + $0xd8] sm:$0xff]
  %v39 = vld [vmem:[%s0 + $0xe0] sm:$0xff]
  %v40 = vld [vmem:[%s0 + $0xe8] sm:$0xff]
  %v41 = vld [vmem:[%s0 + $0xf0] sm:$0xff]
  %v42 = vld [vmem:[%s0 + $0xf8] sm:$0xff]
  %v43 = vld [vmem:[%s0 + $0x100] sm:$0xff]
  %v44 = vld [vmem:[%s0 + $0x108] sm:$0xff]
  %v45 = vld [vmem:[%s0 + $0x110] sm:$0xff]
  %v46 = vld [vmem:[%s0 + $0x118] sm:$0xff]
  %v47 = vld [vmem:[%s0 + $0x120] sm:$0xff]
  %v48 = vld [vmem:[%s0 + $0x128] sm:$0xff]
  %v49 = vld [vmem:[%s0 + $0x130] sm:$0xff]
  %v50 = vld [vmem:[%s0 + $0x138] sm:$0xff]
  %v51 = vld [vmem:[%s0 + $0x140] sm:$0xff]
  %v52 = vld [vmem:[%s0 + $0x148] sm:$0xff]
  %v53 = vld [vmem:[%s0 + $0x150] sm:$0xff]
  %v54 = vld [vmem:[%s0 + $0x158] sm:$0xff]
  %v55 = vld [vmem:[%s0 + $0x160] sm:$0xff]
  %v56 = vld [vmem:[%s0 + $0x168] sm:$0xff]
  %v57 = vld [vmem:[%s0 + $0x170] sm:$0xff]
  %v58 = vld [vmem:[%s0 + $0x178] sm:$0xff]
  %v59 = vld [vmem:[%s1] sm:$0x1]
  %v61 = vlaneseq
  %v62 = vshrl.u32 %v61, 7
  %v63 = vsub.s32 0, %v62
  %v64 = vrot.slane %v59, %v63
  %v66 = vmul.f32 %v11, %v64
  %v67 = vmul.f32 %v12, %v64
  %v68 = vmul.f32 %v13, %v64
  %v69 = vmul.f32 %v14, %v64
  %v70 = vmul.f32 %v15, %v64
  %v71 = vmul.f32 %v16, %v64
  %v72 = vmul.f32 %v17, %v64
  %v73 = vmul.f32 %v18, %v64
  %v74 = vmul.f32 %v19, %v64
  %v75 = vmul.f32 %v20, %v64
  %v76 = vmul.f32 %v21, %v64
  %v77 = vmul.f32 %v22, %v64
  %v78 = vmul.f32 %v23, %v64
  %v79 = vmul.f32 %v24, %v64
  %v80 = vmul.f32 %v25, %v64
  %v81 = vmul.f32 %v26, %v64
  %v82 = vmul.f32 %v27, %v64
  %v83 = vmul.f32 %v28, %v64
  %v84 = vmul.f32 %v29, %v64
  %v85 = vmul.f32 %v30, %v64
  %v86 = vmul.f32 %v31, %v64
  %v87 = vmul.f32 %v32, %v64
  %v88 = vmul.f32 %v33, %v64
  %v89 = vmul.f32 %v34, %v64
  %v90 = vmul.f32 %v35, %v64
  %v91 = vmul.f32 %v36, %v64
  %v92 = vmul.f32 %v37, %v64
  %v93 = vmul.f32 %v38, %v64
  %v94 = vmul.f32 %v39, %v64
  %v95 = vmul.f32 %v40, %v64
  %v96 = vmul.f32 %v41, %v64
  %v97 = vmul.f32 %v42, %v64
  %v98 = vmul.f32 %v43, %v64
  %v99 = vmul.f32 %v44, %v64
  %v100 = vmul.f32 %v45, %v64
  %v101 = vmul.f32 %v46, %v64
  %v102 = vmul.f32 %v47, %v64
  %v103 = vmul.f32 %v48, %v64
  %v104 = vmul.f32 %v49, %v64
  %v105 = vmul.f32 %v50, %v64
  %v106 = vmul.f32 %v51, %v64
  %v107 = vmul.f32 %v52, %v64
  %v108 = vmul.f32 %v53, %v64
  %v109 = vmul.f32 %v54, %v64
  %v110 = vmul.f32 %v55, %v64
  %v111 = vmul.f32 %v56, %v64
  %v112 = vmul.f32 %v57, %v64
  %v113 = vmul.f32 %v58, %v64
  %vm114 = vcmask 261120
  %v115 = vsel %vm114, %v66, 0.0
  %116 = vadd.xlane.f32.xlu0 %v115
  %v117 = vpop.xlane.xlu0 %116
  %v118 = vsel %vm114, %v67, 0.0
  %119 = vadd.xlane.f32.xlu0 %v118
  %v120 = vpop.xlane.xlu0 %119
  %v121 = vsel %vm114, %v68, 0.0
  %122 = vadd.xlane.f32.xlu0 %v121
  %v123 = vpop.xlane.xlu0 %122
  %v124 = vsel %vm114, %v69, 0.0
  %125 = vadd.xlane.f32.xlu0 %v124
  %v126 = vpop.xlane.xlu0 %125
  %v127 = vsel %vm114, %v70, 0.0
  %128 = vadd.xlane.f32.xlu0 %v127
  %v129 = vpop.xlane.xlu0 %128
  %v130 = vsel %vm114, %v71, 0.0
  %131 = vadd.xlane.f32.xlu0 %v130
  %v132 = vpop.xlane.xlu0 %131
  %v133 = vsel %vm114, %v72, 0.0
  %134 = vadd.xlane.f32.xlu0 %v133
  %v135 = vpop.xlane.xlu0 %134
  %v136 = vsel %vm114, %v73, 0.0
  %137 = vadd.xlane.f32.xlu0 %v136
  %v138 = vpop.xlane.xlu0 %137
  %v139 = vsel %vm114, %v74, 0.0
  %140 = vadd.xlane.f32.xlu0 %v139
  %v141 = vpop.xlane.xlu0 %140
  %v142 = vsel %vm114, %v75, 0.0
  %143 = vadd.xlane.f32.xlu0 %v142
  %v144 = vpop.xlane.xlu0 %143
  %v145 = vsel %vm114, %v76, 0.0
  %146 = vadd.xlane.f32.xlu0 %v145
  %v147 = vpop.xlane.xlu0 %146
  %v148 = vsel %vm114, %v77, 0.0
  %149 = vadd.xlane.f32.xlu0 %v148
  %v150 = vpop.xlane.xlu0 %149
  %v151 = vsel %vm114, %v78, 0.0
  %152 = vadd.xlane.f32.xlu0 %v151
  %v153 = vpop.xlane.xlu0 %152
  %v154 = vsel %vm114, %v79, 0.0
  %155 = vadd.xlane.f32.xlu0 %v154
  %v156 = vpop.xlane.xlu0 %155
  %v157 = vsel %vm114, %v80, 0.0
  %158 = vadd.xlane.f32.xlu0 %v157
  %v159 = vpop.xlane.xlu0 %158
  %v160 = vsel %vm114, %v81, 0.0
  %161 = vadd.xlane.f32.xlu0 %v160
  %v162 = vpop.xlane.xlu0 %161
  %v163 = vsel %vm114, %v82, 0.0
  %164 = vadd.xlane.f32.xlu0 %v163
  %v165 = vpop.xlane.xlu0 %164
  %v166 = vsel %vm114, %v83, 0.0
  %167 = vadd.xlane.f32.xlu0 %v166
  %v168 = vpop.xlane.xlu0 %167
  %v169 = vsel %vm114, %v84, 0.0
  %170 = vadd.xlane.f32.xlu0 %v169
  %v171 = vpop.xlane.xlu0 %170
  %v172 = vsel %vm114, %v85, 0.0
  %173 = vadd.xlane.f32.xlu0 %v172
  %v174 = vpop.xlane.xlu0 %173
  %v175 = vsel %vm114, %v86, 0.0
  %176 = vadd.xlane.f32.xlu0 %v175
  %v177 = vpop.xlane.xlu0 %176
  %v178 = vsel %vm114, %v87, 0.0
  %179 = vadd.xlane.f32.xlu0 %v178
  %v180 = vpop.xlane.xlu0 %179
  %v181 = vsel %vm114, %v88, 0.0
  %182 = vadd.xlane.f32.xlu0 %v181
  %v183 = vpop.xlane.xlu0 %182
  %v184 = vsel %vm114, %v89, 0.0
  %185 = vadd.xlane.f32.xlu0 %v184
  %v186 = vpop.xlane.xlu0 %185
  %v187 = vsel %vm114, %v90, 0.0
  %188 = vadd.xlane.f32.xlu0 %v187
  %v189 = vpop.xlane.xlu0 %188
  %v190 = vsel %vm114, %v91, 0.0
  %191 = vadd.xlane.f32.xlu0 %v190
  %v192 = vpop.xlane.xlu0 %191
  %v193 = vsel %vm114, %v92, 0.0
  %194 = vadd.xlane.f32.xlu0 %v193
  %v195 = vpop.xlane.xlu0 %194
  %v196 = vsel %vm114, %v93, 0.0
  %197 = vadd.xlane.f32.xlu0 %v196
  %v198 = vpop.xlane.xlu0 %197
  %v199 = vsel %vm114, %v94, 0.0
  %200 = vadd.xlane.f32.xlu0 %v199
  %v201 = vpop.xlane.xlu0 %200
  %v202 = vsel %vm114, %v95, 0.0
  %203 = vadd.xlane.f32.xlu0 %v202
  %v204 = vpop.xlane.xlu0 %203
  %v205 = vsel %vm114, %v96, 0.0
  %206 = vadd.xlane.f32.xlu0 %v205
  %v207 = vpop.xlane.xlu0 %206
  %v208 = vsel %vm114, %v97, 0.0
  %209 = vadd.xlane.f32.xlu0 %v208
  %v210 = vpop.xlane.xlu0 %209
  %v211 = vsel %vm114, %v98, 0.0
  %212 = vadd.xlane.f32.xlu0 %v211
  %v213 = vpop.xlane.xlu0 %212
  %v214 = vsel %vm114, %v99, 0.0
  %215 = vadd.xlane.f32.xlu0 %v214
  %v216 = vpop.xlane.xlu0 %215
  %v217 = vsel %vm114, %v100, 0.0
  %218 = vadd.xlane.f32.xlu0 %v217
  %v219 = vpop.xlane.xlu0 %218
  %v220 = vsel %vm114, %v101, 0.0
  %221 = vadd.xlane.f32.xlu0 %v220
  %v222 = vpop.xlane.xlu0 %221
  %v223 = vsel %vm114, %v102, 0.0
  %224 = vadd.xlane.f32.xlu0 %v223
  %v225 = vpop.xlane.xlu0 %224
  %v226 = vsel %vm114, %v103, 0.0
  %227 = vadd.xlane.f32.xlu0 %v226
  %v228 = vpop.xlane.xlu0 %227
  %v229 = vsel %vm114, %v104, 0.0
  %230 = vadd.xlane.f32.xlu0 %v229
  %v231 = vpop.xlane.xlu0 %230
  %v232 = vsel %vm114, %v105, 0.0
  %233 = vadd.xlane.f32.xlu0 %v232
  %v234 = vpop.xlane.xlu0 %233
  %v235 = vsel %vm114, %v106, 0.0
  %236 = vadd.xlane.f32.xlu0 %v235
  %v237 = vpop.xlane.xlu0 %236
  %v238 = vsel %vm114, %v107, 0.0
  %239 = vadd.xlane.f32.xlu0 %v238
  %v240 = vpop.xlane.xlu0 %239
  %v241 = vsel %vm114, %v108, 0.0
  %242 = vadd.xlane.f32.xlu0 %v241
  %v243 = vpop.xlane.xlu0 %242
  %v244 = vsel %vm114, %v109, 0.0
  %245 = vadd.xlane.f32.xlu0 %v244
  %v246 = vpop.xlane.xlu0 %245
  %v247 = vsel %vm114, %v110, 0.0
  %248 = vadd.xlane.f32.xlu0 %v247
  %v249 = vpop.xlane.xlu0 %248
  %v250 = vsel %vm114, %v111, 0.0
  %251 = vadd.xlane.f32.xlu0 %v250
  %v252 = vpop.xlane.xlu0 %251
  %v253 = vsel %vm114, %v112, 0.0
  %254 = vadd.xlane.f32.xlu0 %v253
  %v255 = vpop.xlane.xlu0 %254
  %v256 = vsel %vm114, %v113, 0.0
  %257 = vadd.xlane.f32.xlu0 %v256
  %v258 = vpop.xlane.xlu0 %257
  %v259 = vmax.f32 %v117, 0.0
  %v260 = vmax.f32 %v120, 0.0
  %v261 = vmax.f32 %v123, 0.0
  %v262 = vmax.f32 %v126, 0.0
  %v263 = vmax.f32 %v129, 0.0
  %v264 = vmax.f32 %v132, 0.0
  %v265 = vmax.f32 %v135, 0.0
  %v266 = vmax.f32 %v138, 0.0
  %v267 = vmax.f32 %v141, 0.0
  %v268 = vmax.f32 %v144, 0.0
  %v269 = vmax.f32 %v147, 0.0
  %v270 = vmax.f32 %v150, 0.0
  %v271 = vmax.f32 %v153, 0.0
  %v272 = vmax.f32 %v156, 0.0
  %v273 = vmax.f32 %v159, 0.0
  %v274 = vmax.f32 %v162, 0.0
  %v275 = vmax.f32 %v165, 0.0
  %v276 = vmax.f32 %v168, 0.0
  %v277 = vmax.f32 %v171, 0.0
  %v278 = vmax.f32 %v174, 0.0
  %v279 = vmax.f32 %v177, 0.0
  %v280 = vmax.f32 %v180, 0.0
  %v281 = vmax.f32 %v183, 0.0
  %v282 = vmax.f32 %v186, 0.0
  %v283 = vmax.f32 %v189, 0.0
  %v284 = vmax.f32 %v192, 0.0
  %v285 = vmax.f32 %v195, 0.0
  %v286 = vmax.f32 %v198, 0.0
  %v287 = vmax.f32 %v201, 0.0
  %v288 = vmax.f32 %v204, 0.0
  %v289 = vmax.f32 %v207, 0.0
  %v290 = vmax.f32 %v210, 0.0
  %v291 = vmax.f32 %v213, 0.0
  %v292 = vmax.f32 %v216, 0.0
  %v293 = vmax.f32 %v219, 0.0
  %v294 = vmax.f32 %v222, 0.0
  %v295 = vmax.f32 %v225, 0.0
  %v296 = vmax.f32 %v228, 0.0
  %v297 = vmax.f32 %v231, 0.0
  %v298 = vmax.f32 %v234, 0.0
  %v299 = vmax.f32 %v237, 0.0
  %v300 = vmax.f32 %v240, 0.0
  %v301 = vmax.f32 %v243, 0.0
  %v302 = vmax.f32 %v246, 0.0
  %v303 = vmax.f32 %v249, 0.0
  %v304 = vmax.f32 %v252, 0.0
  %v305 = vmax.f32 %v255, 0.0
  %v306 = vmax.f32 %v258, 0.0
  %v307 = vsub.f32 0.0, %v259
  %v308 = vsub.f32 0.0, %v260
  %v309 = vsub.f32 0.0, %v261
  %v310 = vsub.f32 0.0, %v262
  %v311 = vsub.f32 0.0, %v263
  %v312 = vsub.f32 0.0, %v264
  %v313 = vsub.f32 0.0, %v265
  %v314 = vsub.f32 0.0, %v266
  %v315 = vsub.f32 0.0, %v267
  %v316 = vsub.f32 0.0, %v268
  %v317 = vsub.f32 0.0, %v269
  %v318 = vsub.f32 0.0, %v270
  %v319 = vsub.f32 0.0, %v271
  %v320 = vsub.f32 0.0, %v272
  %v321 = vsub.f32 0.0, %v273
  %v322 = vsub.f32 0.0, %v274
  %v323 = vsub.f32 0.0, %v275
  %v324 = vsub.f32 0.0, %v276
  %v325 = vsub.f32 0.0, %v277
  %v326 = vsub.f32 0.0, %v278
  %v327 = vsub.f32 0.0, %v279
  %v328 = vsub.f32 0.0, %v280
  %v329 = vsub.f32 0.0, %v281
  %v330 = vsub.f32 0.0, %v282
  %v331 = vsub.f32 0.0, %v283
  %v332 = vsub.f32 0.0, %v284
  %v333 = vsub.f32 0.0, %v285
  %v334 = vsub.f32 0.0, %v286
  %v335 = vsub.f32 0.0, %v287
  %v336 = vsub.f32 0.0, %v288
  %v337 = vsub.f32 0.0, %v289
  %v338 = vsub.f32 0.0, %v290
  %v339 = vsub.f32 0.0, %v291
  %v340 = vsub.f32 0.0, %v292
  %v341 = vsub.f32 0.0, %v293
  %v342 = vsub.f32 0.0, %v294
  %v343 = vsub.f32 0.0, %v295
  %v344 = vsub.f32 0.0, %v296
  %v345 = vsub.f32 0.0, %v297
  %v346 = vsub.f32 0.0, %v298
  %v347 = vsub.f32 0.0, %v299
  %v348 = vsub.f32 0.0, %v300
  %v349 = vsub.f32 0.0, %v301
  %v350 = vsub.f32 0.0, %v302
  %v351 = vsub.f32 0.0, %v303
  %v352 = vsub.f32 0.0, %v304
  %v353 = vsub.f32 0.0, %v305
  %v354 = vsub.f32 0.0, %v306
  %v355 = vmul.f32 %v307, 1.442695
  %v356 = vpow.pop %v355
  %v357 = vmul.f32 %v308, 1.442695
  %v358 = vpow.pop %v357
  %v359 = vmul.f32 %v309, 1.442695
  %v360 = vpow.pop %v359
  %v361 = vmul.f32 %v310, 1.442695
  %v362 = vpow.pop %v361
  %v363 = vmul.f32 %v311, 1.442695
  %v364 = vpow.pop %v363
  %v365 = vmul.f32 %v312, 1.442695
  %v366 = vpow.pop %v365
  %v367 = vmul.f32 %v313, 1.442695
  %v368 = vpow.pop %v367
  %v369 = vmul.f32 %v314, 1.442695
  %v370 = vpow.pop %v369
  %v371 = vmul.f32 %v315, 1.442695
  %v372 = vpow.pop %v371
  %v373 = vmul.f32 %v316, 1.442695
  %v374 = vpow.pop %v373
  %v375 = vmul.f32 %v317, 1.442695
  %v376 = vpow.pop %v375
  %v377 = vmul.f32 %v318, 1.442695
  %v378 = vpow.pop %v377
  %v379 = vmul.f32 %v319, 1.442695
  %v380 = vpow.pop %v379
  %v381 = vmul.f32 %v320, 1.442695
  %v382 = vpow.pop %v381
  %v383 = vmul.f32 %v321, 1.442695
  %v384 = vpow.pop %v383
  %v385 = vmul.f32 %v322, 1.442695
  %v386 = vpow.pop %v385
  %v387 = vmul.f32 %v323, 1.442695
  %v388 = vpow.pop %v387
  %v389 = vmul.f32 %v324, 1.442695
  %v390 = vpow.pop %v389
  %v391 = vmul.f32 %v325, 1.442695
  %v392 = vpow.pop %v391
  %v393 = vmul.f32 %v326, 1.442695
  %v394 = vpow.pop %v393
  %v395 = vmul.f32 %v327, 1.442695
  %v396 = vpow.pop %v395
  %v397 = vmul.f32 %v328, 1.442695
  %v398 = vpow.pop %v397
  %v399 = vmul.f32 %v329, 1.442695
  %v400 = vpow.pop %v399
  %v401 = vmul.f32 %v330, 1.442695
  %v402 = vpow.pop %v401
  %v403 = vmul.f32 %v331, 1.442695
  %v404 = vpow.pop %v403
  %v405 = vmul.f32 %v332, 1.442695
  %v406 = vpow.pop %v405
  %v407 = vmul.f32 %v333, 1.442695
  %v408 = vpow.pop %v407
  %v409 = vmul.f32 %v334, 1.442695
  %v410 = vpow.pop %v409
  %v411 = vmul.f32 %v335, 1.442695
  %v412 = vpow.pop %v411
  %v413 = vmul.f32 %v336, 1.442695
  %v414 = vpow.pop %v413
  %v415 = vmul.f32 %v337, 1.442695
  %v416 = vpow.pop %v415
  %v417 = vmul.f32 %v338, 1.442695
  %v418 = vpow.pop %v417
  %v419 = vmul.f32 %v339, 1.442695
  %v420 = vpow.pop %v419
  %v421 = vmul.f32 %v340, 1.442695
  %v422 = vpow.pop %v421
  %v423 = vmul.f32 %v341, 1.442695
  %v424 = vpow.pop %v423
  %v425 = vmul.f32 %v342, 1.442695
  %v426 = vpow.pop %v425
  %v427 = vmul.f32 %v343, 1.442695
  %v428 = vpow.pop %v427
  %v429 = vmul.f32 %v344, 1.442695
  %v430 = vpow.pop %v429
  %v431 = vmul.f32 %v345, 1.442695
  %v432 = vpow.pop %v431
  %v433 = vmul.f32 %v346, 1.442695
  %v434 = vpow.pop %v433
  %v435 = vmul.f32 %v347, 1.442695
  %v436 = vpow.pop %v435
  %v437 = vmul.f32 %v348, 1.442695
  %v438 = vpow.pop %v437
  %v439 = vmul.f32 %v349, 1.442695
  %v440 = vpow.pop %v439
  %v441 = vmul.f32 %v350, 1.442695
  %v442 = vpow.pop %v441
  %v443 = vmul.f32 %v351, 1.442695
  %v444 = vpow.pop %v443
  %v445 = vmul.f32 %v352, 1.442695
  %v446 = vpow.pop %v445
  %v447 = vmul.f32 %v353, 1.442695
  %v448 = vpow.pop %v447
  %v449 = vmul.f32 %v354, 1.442695
  %v450 = vpow.pop %v449
  %v499 = vlaneseq
  %v500 = vand.u32 %v499, 127
  %v501 = vlaneseq
  %v502 = vshrl.u32 %v501, 7
  %v503 = vsub.s32 %v500, %v502
  %v504 = vrot.slane %v356, %v503
  %v505 = vadd.s32 %v500, 4294967288
  %v506 = vlaneseq
  %v507 = vshrl.u32 %v506, 7
  %v508 = vsub.s32 %v505, %v507
  %v509 = vrot.slane %v358, %v508
  %vm510 = vcmask 130112
  %v511 = vsel %vm510, %v509, %v504
  %v512 = vadd.s32 %v500, 4294967280
  %v513 = vlaneseq
  %v514 = vshrl.u32 %v513, 7
  %v515 = vsub.s32 %v512, %v514
  %v516 = vrot.slane %v360, %v515
  %vm517 = vcmask 195712
  %v518 = vsel %vm517, %v516, %v511
  %v519 = vadd.s32 %v500, 4294967272
  %v520 = vlaneseq
  %v521 = vshrl.u32 %v520, 7
  %v522 = vsub.s32 %v519, %v521
  %v523 = vrot.slane %v362, %v522
  %vm524 = vcmask 261312
  %v525 = vsel %vm524, %v523, %v518
  %v526 = vadd.s32 %v500, 4294967264
  %v527 = vlaneseq
  %v528 = vshrl.u32 %v527, 7
  %v529 = vsub.s32 %v526, %v528
  %v530 = vrot.slane %v364, %v529
  %vm531 = vcmask 326912
  %v532 = vsel %vm531, %v530, %v525
  %v533 = vadd.s32 %v500, 4294967256
  %v534 = vlaneseq
  %v535 = vshrl.u32 %v534, 7
  %v536 = vsub.s32 %v533, %v535
  %v537 = vrot.slane %v366, %v536
  %vm538 = vcmask 392512
  %v539 = vsel %vm538, %v537, %v532
  %v540 = vadd.s32 %v500, 4294967248
  %v541 = vlaneseq
  %v542 = vshrl.u32 %v541, 7
  %v543 = vsub.s32 %v540, %v542
  %v544 = vrot.slane %v368, %v543
  %vm545 = vcmask 458112
  %v546 = vsel %vm545, %v544, %v539
  %v547 = vadd.s32 %v500, 4294967240
  %v548 = vlaneseq
  %v549 = vshrl.u32 %v548, 7
  %v550 = vsub.s32 %v547, %v549
  %v551 = vrot.slane %v370, %v550
  %vm552 = vcmask 523712
  %v553 = vsel %vm552, %v551, %v546
  %v554 = vadd.s32 %v500, 4294967232
  %v555 = vlaneseq
  %v556 = vshrl.u32 %v555, 7
  %v557 = vsub.s32 %v554, %v556
  %v558 = vrot.slane %v372, %v557
  %vm559 = vcmask 589312
  %v560 = vsel %vm559, %v558, %v553
  %v561 = vadd.s32 %v500, 4294967224
  %v562 = vlaneseq
  %v563 = vshrl.u32 %v562, 7
  %v564 = vsub.s32 %v561, %v563
  %v565 = vrot.slane %v374, %v564
  %vm566 = vcmask 654912
  %v567 = vsel %vm566, %v565, %v560
  %v568 = vadd.s32 %v500, 4294967216
  %v569 = vlaneseq
  %v570 = vshrl.u32 %v569, 7
  %v571 = vsub.s32 %v568, %v570
  %v572 = vrot.slane %v376, %v571
  %vm573 = vcmask 720512
  %v574 = vsel %vm573, %v572, %v567
  %v575 = vadd.s32 %v500, 4294967208
  %v576 = vlaneseq
  %v577 = vshrl.u32 %v576, 7
  %v578 = vsub.s32 %v575, %v577
  %v579 = vrot.slane %v378, %v578
  %vm580 = vcmask 786112
  %v581 = vsel %vm580, %v579, %v574
  %v582 = vadd.s32 %v500, 4294967200
  %v583 = vlaneseq
  %v584 = vshrl.u32 %v583, 7
  %v585 = vsub.s32 %v582, %v584
  %v586 = vrot.slane %v380, %v585
  %vm587 = vcmask 851712
  %v588 = vsel %vm587, %v586, %v581
  %v589 = vadd.s32 %v500, 4294967192
  %v590 = vlaneseq
  %v591 = vshrl.u32 %v590, 7
  %v592 = vsub.s32 %v589, %v591
  %v593 = vrot.slane %v382, %v592
  %vm594 = vcmask 917312
  %v595 = vsel %vm594, %v593, %v588
  %v596 = vadd.s32 %v500, 4294967184
  %v597 = vlaneseq
  %v598 = vshrl.u32 %v597, 7
  %v599 = vsub.s32 %v596, %v598
  %v600 = vrot.slane %v384, %v599
  %vm601 = vcmask 982912
  %v602 = vsel %vm601, %v600, %v595
  %v603 = vadd.s32 %v500, 4294967176
  %v604 = vlaneseq
  %v605 = vshrl.u32 %v604, 7
  %v606 = vsub.s32 %v603, %v605
  %v607 = vrot.slane %v386, %v606
  %vm608 = vcmask 1048512
  %v609 = vsel %vm608, %v607, %v602
  %v610 = vlaneseq
  %v611 = vshrl.u32 %v610, 7
  %v612 = vsub.s32 %v500, %v611
  %v613 = vrot.slane %v388, %v612
  %v614 = vlaneseq
  %v615 = vshrl.u32 %v614, 7
  %v616 = vsub.s32 %v505, %v615
  %v617 = vrot.slane %v390, %v616
  %v618 = vsel %vm510, %v617, %v613
  %v619 = vlaneseq
  %v620 = vshrl.u32 %v619, 7
  %v621 = vsub.s32 %v512, %v620
  %v622 = vrot.slane %v392, %v621
  %v623 = vsel %vm517, %v622, %v618
  %v624 = vlaneseq
  %v625 = vshrl.u32 %v624, 7
  %v626 = vsub.s32 %v519, %v625
  %v627 = vrot.slane %v394, %v626
  %v628 = vsel %vm524, %v627, %v623
  %v629 = vlaneseq
  %v630 = vshrl.u32 %v629, 7
  %v631 = vsub.s32 %v526, %v630
  %v632 = vrot.slane %v396, %v631
  %v633 = vsel %vm531, %v632, %v628
  %v634 = vlaneseq
  %v635 = vshrl.u32 %v634, 7
  %v636 = vsub.s32 %v533, %v635
  %v637 = vrot.slane %v398, %v636
  %v638 = vsel %vm538, %v637, %v633
  %v639 = vlaneseq
  %v640 = vshrl.u32 %v639, 7
  %v641 = vsub.s32 %v540, %v640
  %v642 = vrot.slane %v400, %v641
  %v643 = vsel %vm545, %v642, %v638
  %v644 = vlaneseq
  %v645 = vshrl.u32 %v644, 7
  %v646 = vsub.s32 %v547, %v645
  %v647 = vrot.slane %v402, %v646
  %v648 = vsel %vm552, %v647, %v643
  %v649 = vlaneseq
  %v650 = vshrl.u32 %v649, 7
  %v651 = vsub.s32 %v554, %v650
  %v652 = vrot.slane %v404, %v651
  %v653 = vsel %vm559, %v652, %v648
  %v654 = vlaneseq
  %v655 = vshrl.u32 %v654, 7
  %v656 = vsub.s32 %v561, %v655
  %v657 = vrot.slane %v406, %v656
  %v658 = vsel %vm566, %v657, %v653
  %v659 = vlaneseq
  %v660 = vshrl.u32 %v659, 7
  %v661 = vsub.s32 %v568, %v660
  %v662 = vrot.slane %v408, %v661
  %v663 = vsel %vm573, %v662, %v658
  %v664 = vlaneseq
  %v665 = vshrl.u32 %v664, 7
  %v666 = vsub.s32 %v575, %v665
  %v667 = vrot.slane %v410, %v666
  %v668 = vsel %vm580, %v667, %v663
  %v669 = vlaneseq
  %v670 = vshrl.u32 %v669, 7
  %v671 = vsub.s32 %v582, %v670
  %v672 = vrot.slane %v412, %v671
  %v673 = vsel %vm587, %v672, %v668
  %v674 = vlaneseq
  %v675 = vshrl.u32 %v674, 7
  %v676 = vsub.s32 %v589, %v675
  %v677 = vrot.slane %v414, %v676
  %v678 = vsel %vm594, %v677, %v673
  %v679 = vlaneseq
  %v680 = vshrl.u32 %v679, 7
  %v681 = vsub.s32 %v596, %v680
  %v682 = vrot.slane %v416, %v681
  %v683 = vsel %vm601, %v682, %v678
  %v684 = vlaneseq
  %v685 = vshrl.u32 %v684, 7
  %v686 = vsub.s32 %v603, %v685
  %v687 = vrot.slane %v418, %v686
  %v688 = vsel %vm608, %v687, %v683
  %v689 = vlaneseq
  %v690 = vshrl.u32 %v689, 7
  %v691 = vsub.s32 %v500, %v690
  %v692 = vrot.slane %v420, %v691
  %v693 = vlaneseq
  %v694 = vshrl.u32 %v693, 7
  %v695 = vsub.s32 %v505, %v694
  %v696 = vrot.slane %v422, %v695
  %v697 = vsel %vm510, %v696, %v692
  %v698 = vlaneseq
  %v699 = vshrl.u32 %v698, 7
  %v700 = vsub.s32 %v512, %v699
  %v701 = vrot.slane %v424, %v700
  %v702 = vsel %vm517, %v701, %v697
  %v703 = vlaneseq
  %v704 = vshrl.u32 %v703, 7
  %v705 = vsub.s32 %v519, %v704
  %v706 = vrot.slane %v426, %v705
  %v707 = vsel %vm524, %v706, %v702
  %v708 = vlaneseq
  %v709 = vshrl.u32 %v708, 7
  %v710 = vsub.s32 %v526, %v709
  %v711 = vrot.slane %v428, %v710
  %v712 = vsel %vm531, %v711, %v707
  %v713 = vlaneseq
  %v714 = vshrl.u32 %v713, 7
  %v715 = vsub.s32 %v533, %v714
  %v716 = vrot.slane %v430, %v715
  %v717 = vsel %vm538, %v716, %v712
  %v718 = vlaneseq
  %v719 = vshrl.u32 %v718, 7
  %v720 = vsub.s32 %v540, %v719
  %v721 = vrot.slane %v432, %v720
  %v722 = vsel %vm545, %v721, %v717
  %v723 = vlaneseq
  %v724 = vshrl.u32 %v723, 7
  %v725 = vsub.s32 %v547, %v724
  %v726 = vrot.slane %v434, %v725
  %v727 = vsel %vm552, %v726, %v722
  %v728 = vlaneseq
  %v729 = vshrl.u32 %v728, 7
  %v730 = vsub.s32 %v554, %v729
  %v731 = vrot.slane %v436, %v730
  %v732 = vsel %vm559, %v731, %v727
  %v733 = vlaneseq
  %v734 = vshrl.u32 %v733, 7
  %v735 = vsub.s32 %v561, %v734
  %v736 = vrot.slane %v438, %v735
  %v737 = vsel %vm566, %v736, %v732
  %v738 = vlaneseq
  %v739 = vshrl.u32 %v738, 7
  %v740 = vsub.s32 %v568, %v739
  %v741 = vrot.slane %v440, %v740
  %v742 = vsel %vm573, %v741, %v737
  %v743 = vlaneseq
  %v744 = vshrl.u32 %v743, 7
  %v745 = vsub.s32 %v575, %v744
  %v746 = vrot.slane %v442, %v745
  %v747 = vsel %vm580, %v746, %v742
  %v748 = vlaneseq
  %v749 = vshrl.u32 %v748, 7
  %v750 = vsub.s32 %v582, %v749
  %v751 = vrot.slane %v444, %v750
  %v752 = vsel %vm587, %v751, %v747
  %v753 = vlaneseq
  %v754 = vshrl.u32 %v753, 7
  %v755 = vsub.s32 %v589, %v754
  %v756 = vrot.slane %v446, %v755
  %v757 = vsel %vm594, %v756, %v752
  %v758 = vlaneseq
  %v759 = vshrl.u32 %v758, 7
  %v760 = vsub.s32 %v596, %v759
  %v761 = vrot.slane %v448, %v760
  %v762 = vsel %vm601, %v761, %v757
  %v763 = vlaneseq
  %v764 = vshrl.u32 %v763, 7
  %v765 = vsub.s32 %v603, %v764
  %v766 = vrot.slane %v450, %v765
  %v767 = vsel %vm608, %v766, %v762
  %vm768 = vcmask 1041409
  %v769 = vsel %vm768, %v688, %v609
  %vm770 = vcmask 1042434
  %v771 = vsel %vm770, %v767, %v769
  %773 = vst [vmem:[%s2] sm:$0x7] %v771
  // Predicated region
  $region10: #{tpu_custom_call.1} parent=0 // pred_check
    _
  $region11: #{tpu_custom_call.1} parent=0 // pred_check_branch
    %775 = sbr.rel (0) target = $region13
  $region12: #{tpu_custom_call.1} parent=0 // pred_region
    _
  $region13: #{tpu_custom_call.1} parent=0 // pred_fallthru
    _
  // Predicated region
  $region14: #{tpu_custom_call.1} parent=0 // pred_check
    _
  $region15: #{tpu_custom_call.1} parent=0 // pred_check_branch
    %777 = sbr.rel (0) target = $region17
  $region16: #{tpu_custom_call.1} parent=0 // pred_region
    _
  $region17: #{tpu_custom_call.1} parent=0 // pred_fallthru
    _

</llo_original>
